<compile_context>
chip_gen: v6e
topology: v6e:2x2x1
jax: 0.10.0
libtpu: 0.0.40
codegen_flags: <defaults>
</compile_context>

<pallas_src>
import functools

import jax
import jax.numpy as jnp
from jax import lax
from jax.experimental import pallas as pl
from jax.experimental.pallas import tpu as pltpu

F32 = jnp.float32
BF16 = jnp.bfloat16


# ----------------------------------------------------------------------------------
# Fused per-batch kernel: stacked QKV projection, energy/softmax, pool-folded value
# contraction, gamma*out + x residual (pooled), fc1, (dropout=identity), relu(fc2).
# ----------------------------------------------------------------------------------
def _attention_pool_fc_kernel(x_ref, wqkv_ref, bqkv_ref, gamma_ref,
                              w1_ref, b1_ref, w2_ref, b2_ref, o_ref, *, cq_pad):
    # x_ref    : [C, HW]           bf16  (batch dim squeezed by BlockSpec)
    # wqkv_ref : [2*Cq_pad+C, C]   bf16  (stacked query/key/value 1x1-conv weights)
    # bqkv_ref : [2*Cq_pad+C, 1]   f32
    # gamma    : [1, 1]            f32
    # w1/w2    : bf16 (w2 lane-padded to 128), b1/b2: f32
    # o_ref    : [8, NC_pad]       f32   (batch dim squeezed; logits broadcast on sublanes)
    x_bf = x_ref[...]                                                   # [C, HW] bf16

    # Fused Q/K/V 1x1 convs == one channel matmul on the MXU, f32 accumulation.
    qkv = jnp.dot(wqkv_ref[...], x_bf,
                  preferred_element_type=F32) + bqkv_ref[...]           # [M, HW] f32
    q = qkv[:cq_pad, :]                                                 # [Cq_pad, HW]
    k = qkv[cq_pad:2 * cq_pad, :]                                       # [Cq_pad, HW]
    v = qkv[2 * cq_pad:, :]                                             # [C, HW]  f32

    # energy[i, j] = sum_c q[c, i] * k[c, j]   == torch.bmm(query^T, key)
    # (contraction-dim dot_general: no materialized transpose; zero-padded Cq rows add 0)
    energy = lax.dot_general(q.astype(BF16), k.astype(BF16),
                             (((0,), (0,)), ((), ())),
                             preferred_element_type=F32)                # [HW, HW]
    # softmax over last axis (exact divide for parity with torch softmax)
    energy = energy - jnp.max(energy, axis=-1, keepdims=True)
    p = jnp.exp(energy)
    att = p / jnp.sum(p, axis=-1, keepdims=True)                        # [HW, HW]

    # Pool folding: AdaptiveAvgPool2d((1,1)) of (value @ att^T) ==
    #   sum_j v[c, j] * mean_i att[i, j]        (numerically identical by linearity)
    att_colmean = jnp.mean(att, axis=0, keepdims=True)                  # [1, HW]
    out_pool = jnp.sum(v * att_colmean, axis=-1, keepdims=True)         # [C, 1]
    x_pool = jnp.mean(x_bf.astype(F32), axis=-1, keepdims=True)         # [C, 1]
    pooled = gamma_ref[...] * out_pool + x_pool                         # gamma*out + x, pooled

    # fc1: contract over C (no transpose materialized) -> [1, H1]
    h = lax.dot_general(pooled.astype(BF16), w1_ref[...],
                        (((0,), (0,)), ((), ())),
                        preferred_element_type=F32) + b1_ref[...]
    # TODO(synk): `dropout` callable from the torch forward applied as identity (eval mode).
    logits = jnp.dot(h.astype(BF16), w2_ref[...],
                     preferred_element_type=F32) + b2_ref[...]          # [1, NC_pad]
    out = jnp.maximum(logits, 0.0)                                      # F.relu(fc2(.))
    o_ref[...] = jnp.broadcast_to(out, o_ref.shape)                     # lane-dense store


def attention_pool_fc(feats_nchw, params, *, nc_pad=128):
    B, C, H, W = feats_nchw.shape
    HW = H * W
    # [B, C, H, W] -> [B, C, HW]: free reshape, no transpose/copy; bf16 halves the DMA.
    x = feats_nchw.reshape(B, C, HW).astype(BF16)

    wq, wk, wv = params["wq"], params["wk"], params["wv"]
    bq, bk, bv = params["bq"], params["bk"], params["bv"]
    Cq = wq.shape[0]
    Cq_pad = ((Cq + 7) // 8) * 8                 # 8-aligned sublane boundaries for slicing
    M = 2 * Cq_pad + C

    # Stacked QKV weight/bias; zero padding rows contribute 0 to the energy contraction.
    wqkv = jnp.zeros((M, C), F32)
    wqkv = wqkv.at[:Cq].set(wq).at[Cq_pad:Cq_pad + Cq].set(wk).at[2 * Cq_pad:].set(wv)
    wqkv = wqkv.astype(BF16)
    bqkv = jnp.zeros((M, 1), F32)
    bqkv = bqkv.at[:Cq].set(bq).at[Cq_pad:Cq_pad + Cq].set(bk).at[2 * Cq_pad:].set(bv)

    gamma = params["gamma"].astype(F32)
    w1 = params["w1"].astype(BF16)
    b1 = params["b1"].astype(F32)
    H1 = w1.shape[1]
    NC = params["w2"].shape[1]
    # Lane-dense padded fc2: logits live in the first NC lanes of a 128-wide block.
    w2p = jnp.zeros((H1, nc_pad), F32).at[:, :NC].set(params["w2"]).astype(BF16)
    b2p = jnp.zeros((1, nc_pad), F32).at[:, :NC].set(params["b2"])

    kernel = functools.partial(_attention_pool_fc_kernel, cq_pad=Cq_pad)

    logits_pad = pl.pallas_call(
        kernel,
        out_shape=jax.ShapeDtypeStruct((B, 8, nc_pad), F32),
        grid=(B,),
        in_specs=[
            pl.BlockSpec((None, C, HW), lambda b: (b, 0, 0)),      # x  : per-batch tile
            pl.BlockSpec((M, C), lambda b: (0, 0)),                # wqkv (VMEM-resident)
            pl.BlockSpec((M, 1), lambda b: (0, 0)),                # bqkv
            pl.BlockSpec((1, 1), lambda b: (0, 0)),                # gamma
            pl.BlockSpec((C, H1), lambda b: (0, 0)),               # w1
            pl.BlockSpec((1, H1), lambda b: (0, 0)),               # b1
            pl.BlockSpec((H1, nc_pad), lambda b: (0, 0)),          # w2 (lane padded)
            pl.BlockSpec((1, nc_pad), lambda b: (0, 0)),           # b2 (lane padded)
        ],
        out_specs=pl.BlockSpec((None, 8, nc_pad), lambda b: (b, 0, 0)),
        compiler_params=pltpu.CompilerParams(
            dimension_semantics=("parallel",),      # v7x: shard batch over the 2 TCs
            vmem_limit_bytes=32 * 1024 * 1024,      # explicit budget (raises v5e's 16 MiB default)
        ),
    )(x, wqkv, bqkv, gamma, w1, b1, w2p, b2p)

    return logits_pad[:, 0, :NC]                                       # [B, NC]


# ----------------------------------------------------------------------------------
# Full forward (glue in plain JAX).
# ----------------------------------------------------------------------------------
def my_custom_efficientnet_b0_forward(feats_nchw, targets, params):
    images_outputs = attention_pool_fc(feats_nchw, params)             # [B, NC]

    # nn.CrossEntropyLoss on the relu'd logits (mean reduction).
    logz = jax.nn.logsumexp(images_outputs, axis=-1)
    picked = jnp.take_along_axis(images_outputs, targets[:, None], axis=-1)[:, 0]
    xe_loss = jnp.mean(logz - picked)

    gcam_losses = jnp.float32(0.0)  # TODO(synk): gradcam/cv2/focal-loss path not translatable.
    return images_outputs, targets, xe_loss, gcam_losses


if __name__ == "__main__":
    # Small shapes standing in for the real module (in_features=1280, 7x7 feature map):
    B, C, H, W = 2, 32, 8, 8          # in_features -> 32 (divisible by 8), spatial 8x8
    HIDDEN, NUM_CLASSES = 128, 2
    Cq = C // 8

    key = jax.random.PRNGKey(0)
    ks = jax.random.split(key, 12)

    feats = jax.random.normal(ks[0], (B, C, H, W), F32)   # pre-extracted backbone features
    targets = jnp.array([0, 1], dtype=jnp.int32)

    std = 0.05
    params = {
        # SelfAttention: 1x1 Conv2d weights flattened to [out_c, in_c], biases as [out_c, 1]
        "wq": std * jax.random.normal(ks[1], (Cq, C), F32),
        "bq": std * jax.random.normal(ks[2], (Cq, 1), F32),
        "wk": std * jax.random.normal(ks[3], (Cq, C), F32),
        "bk": std * jax.random.normal(ks[4], (Cq, 1), F32),
        "wv": std * jax.random.normal(ks[5], (C, C), F32),
        "bv": std * jax.random.normal(ks[6], (C, 1), F32),
        "gamma": 0.1 * jnp.ones((1, 1), F32),             # torch init is zeros(1); nonzero here
                                                          # so the attention path is exercised
        # fc1 / fc2 Linear weights stored pre-transposed ([in, out]) so y = x @ W + b
        "w1": std * jax.random.normal(ks[7], (C, HIDDEN), F32),
        "b1": std * jax.random.normal(ks[8], (1, HIDDEN), F32),
        "w2": std * jax.random.normal(ks[9], (HIDDEN, NUM_CLASSES), F32),
        "b2": std * jax.random.normal(ks[10], (1, NUM_CLASSES), F32),
    }

    outputs = my_custom_efficientnet_b0_forward(feats, targets, params)
    jax.block_until_ready(outputs)
    print("KERNEL_OK")
</pallas_src>

<mosaic_0001>
module attributes {stable_mosaic.version = 11 : i64} {
  func.func @_attention_pool_fc_kernel(%arg0: i32, %arg1: memref<1x32x64xbf16, #tpu.memory_space<vmem>>, %arg2: memref<48x32xbf16, #tpu.memory_space<vmem>>, %arg3: memref<48x1xf32, #tpu.memory_space<vmem>>, %arg4: memref<1x1xf32, #tpu.memory_space<vmem>>, %arg5: memref<32x128xbf16, #tpu.memory_space<vmem>>, %arg6: memref<1x128xf32, #tpu.memory_space<vmem>>, %arg7: memref<128x128xbf16, #tpu.memory_space<vmem>>, %arg8: memref<1x128xf32, #tpu.memory_space<vmem>>, %arg9: memref<1x8x128xf32, #tpu.memory_space<vmem>>) attributes {dimension_semantics = [#tpu.dimension_semantics<parallel>], iteration_bounds = array<i64: 2>, scalar_prefetch = 0 : i64, scratch_operands = 0 : i64, tpu.core_type = #tpu.core_type<tc>, window_params = [{transform_indices = @transform_0, window_bounds = array<i64: 1, 32, 64>}, {pipeline_mode = #tpu.pipeline_mode<synchronous>, transform_indices = @transform_1, window_bounds = array<i64: 48, 32>}, {pipeline_mode = #tpu.pipeline_mode<synchronous>, transform_indices = @transform_2, window_bounds = array<i64: 48, 1>}, {pipeline_mode = #tpu.pipeline_mode<synchronous>, transform_indices = @transform_3, window_bounds = array<i64: 1, 1>}, {pipeline_mode = #tpu.pipeline_mode<synchronous>, transform_indices = @transform_4, window_bounds = array<i64: 32, 128>}, {pipeline_mode = #tpu.pipeline_mode<synchronous>, transform_indices = @transform_5, window_bounds = array<i64: 1, 128>}, {pipeline_mode = #tpu.pipeline_mode<synchronous>, transform_indices = @transform_6, window_bounds = array<i64: 128, 128>}, {pipeline_mode = #tpu.pipeline_mode<synchronous>, transform_indices = @transform_7, window_bounds = array<i64: 1, 128>}, {transform_indices = @transform_8, window_bounds = array<i64: 1, 8, 128>}]} {
    %c0 = arith.constant 0 : index
    %c0_0 = arith.constant 0 : index
    %c0_1 = arith.constant 0 : index
    %0 = vector.load %arg1[%c0, %c0_0, %c0_1] : memref<1x32x64xbf16, #tpu.memory_space<vmem>>, vector<1x32x64xbf16>
    %1 = vector.shape_cast %0 : vector<1x32x64xbf16> to vector<32x64xbf16>
    %c0_2 = arith.constant 0 : index
    %c0_3 = arith.constant 0 : index
    %2 = vector.load %arg2[%c0_2, %c0_3] : memref<48x32xbf16, #tpu.memory_space<vmem>>, vector<48x32xbf16>
    %cst = arith.constant dense<0.000000e+00> : vector<48x64xf32>
    %3 = tpu.matmul %2, %1, %cst {dimension_numbers = #tpu.dot_dimension_numbers<[1], [0], [0], [1], [0, 0, 1, 1], [], []>} : vector<48x32xbf16>, vector<32x64xbf16>, vector<48x64xf32> -> vector<48x64xf32>
    %c0_4 = arith.constant 0 : index
    %c0_5 = arith.constant 0 : index
    %4 = vector.load %arg3[%c0_4, %c0_5] : memref<48x1xf32, #tpu.memory_space<vmem>>, vector<48x1xf32>
    %5 = vector.broadcast %4 : vector<48x1xf32> to vector<48x64xf32>
    %6 = arith.addf %3, %5 : vector<48x64xf32>
    %7 = vector.extract_strided_slice %6 {offsets = [0, 0], sizes = [8, 64], strides = [1, 1]} : vector<48x64xf32> to vector<8x64xf32>
    %8 = vector.extract_strided_slice %6 {offsets = [8, 0], sizes = [8, 64], strides = [1, 1]} : vector<48x64xf32> to vector<8x64xf32>
    %9 = vector.extract_strided_slice %6 {offsets = [16, 0], sizes = [32, 64], strides = [1, 1]} : vector<48x64xf32> to vector<32x64xf32>
    %10 = arith.truncf %7 : vector<8x64xf32> to vector<8x64xbf16>
    %11 = arith.truncf %8 : vector<8x64xf32> to vector<8x64xbf16>
    %cst_6 = arith.constant dense<0.000000e+00> : vector<64x64xf32>
    %12 = tpu.matmul %10, %11, %cst_6 {dimension_numbers = #tpu.dot_dimension_numbers<[0], [0], [1], [1], [0, 1, 1, 1], [], []>} : vector<8x64xbf16>, vector<8x64xbf16>, vector<64x64xf32> -> vector<64x64xf32>
    %cst_7 = arith.constant dense<0xFF800000> : vector<64xf32>
    %13 = vector.multi_reduction <maximumf>, %12, %cst_7 [1] : vector<64x64xf32> to vector<64xf32>
    %14 = vector.shape_cast %13 : vector<64xf32> to vector<64x1xf32>
    %15 = vector.broadcast %14 : vector<64x1xf32> to vector<64x64xf32>
    %16 = arith.subf %12, %15 : vector<64x64xf32>
    %17 = math.exp %16 : vector<64x64xf32>
    %cst_8 = arith.constant dense<0.000000e+00> : vector<64xf32>
    %18 = vector.multi_reduction <add>, %17, %cst_8 [1] : vector<64x64xf32> to vector<64xf32>
    %19 = vector.shape_cast %18 : vector<64xf32> to vector<64x1xf32>
    %20 = vector.broadcast %19 : vector<64x1xf32> to vector<64x64xf32>
    %21 = arith.divf %17, %20 : vector<64x64xf32>
    %cst_9 = arith.constant dense<0.000000e+00> : vector<64xf32>
    %22 = vector.multi_reduction <add>, %21, %cst_9 [0] : vector<64x64xf32> to vector<64xf32>
    %23 = vector.shape_cast %22 : vector<64xf32> to vector<1x64xf32>
    %cst_10 = arith.constant 6.400000e+01 : f32
    %24 = vector.broadcast %cst_10 : f32 to vector<1x64xf32>
    %25 = arith.divf %23, %24 : vector<1x64xf32>
    %26 = vector.broadcast %25 : vector<1x64xf32> to vector<32x64xf32>
    %27 = arith.mulf %9, %26 : vector<32x64xf32>
    %cst_11 = arith.constant dense<0.000000e+00> : vector<32xf32>
    %28 = vector.multi_reduction <add>, %27, %cst_11 [1] : vector<32x64xf32> to vector<32xf32>
    %29 = vector.shape_cast %28 : vector<32xf32> to vector<32x1xf32>
    %30 = arith.extf %1 : vector<32x64xbf16> to vector<32x64xf32>
    %cst_12 = arith.constant dense<0.000000e+00> : vector<32xf32>
    %31 = vector.multi_reduction <add>, %30, %cst_12 [1] : vector<32x64xf32> to vector<32xf32>
    %32 = vector.shape_cast %31 : vector<32xf32> to vector<32x1xf32>
    %cst_13 = arith.constant 6.400000e+01 : f32
    %33 = vector.broadcast %cst_13 : f32 to vector<32x1xf32>
    %34 = arith.divf %32, %33 : vector<32x1xf32>
    %c0_14 = arith.constant 0 : index
    %c0_15 = arith.constant 0 : index
    %35 = vector.load %arg4[%c0_14, %c0_15] : memref<1x1xf32, #tpu.memory_space<vmem>>, vector<1x1xf32>
    %36 = vector.broadcast %35 : vector<1x1xf32> to vector<32x1xf32>
    %37 = arith.mulf %36, %29 : vector<32x1xf32>
    %38 = arith.addf %37, %34 : vector<32x1xf32>
    %39 = arith.truncf %38 : vector<32x1xf32> to vector<32x1xbf16>
    %c0_16 = arith.constant 0 : index
    %c0_17 = arith.constant 0 : index
    %40 = vector.load %arg5[%c0_16, %c0_17] : memref<32x128xbf16, #tpu.memory_space<vmem>>, vector<32x128xbf16>
    %cst_18 = arith.constant dense<0.000000e+00> : vector<1x128xf32>
    %41 = tpu.matmul %39, %40, %cst_18 {dimension_numbers = #tpu.dot_dimension_numbers<[0], [0], [1], [1], [0, 1, 1, 1], [], []>} : vector<32x1xbf16>, vector<32x128xbf16>, vector<1x128xf32> -> vector<1x128xf32>
    %c0_19 = arith.constant 0 : index
    %c0_20 = arith.constant 0 : index
    %42 = vector.load %arg6[%c0_19, %c0_20] : memref<1x128xf32, #tpu.memory_space<vmem>>, vector<1x128xf32>
    %43 = arith.addf %41, %42 : vector<1x128xf32>
    %44 = arith.truncf %43 : vector<1x128xf32> to vector<1x128xbf16>
    %c0_21 = arith.constant 0 : index
    %c0_22 = arith.constant 0 : index
    %45 = vector.load %arg7[%c0_21, %c0_22] : memref<128x128xbf16, #tpu.memory_space<vmem>>, vector<128x128xbf16>
    %cst_23 = arith.constant dense<0.000000e+00> : vector<1x128xf32>
    %46 = tpu.matmul %44, %45, %cst_23 {dimension_numbers = #tpu.dot_dimension_numbers<[1], [0], [0], [1], [0, 0, 1, 1], [], []>} : vector<1x128xbf16>, vector<128x128xbf16>, vector<1x128xf32> -> vector<1x128xf32>
    %c0_24 = arith.constant 0 : index
    %c0_25 = arith.constant 0 : index
    %47 = vector.load %arg8[%c0_24, %c0_25] : memref<1x128xf32, #tpu.memory_space<vmem>>, vector<1x128xf32>
    %48 = arith.addf %46, %47 : vector<1x128xf32>
    %cst_26 = arith.constant 0.000000e+00 : f32
    %49 = vector.broadcast %cst_26 : f32 to vector<1x128xf32>
    %50 = arith.maximumf %48, %49 : vector<1x128xf32>
    %51 = vector.shape_cast %50 : vector<1x128xf32> to vector<1x128xf32>
    %52 = vector.broadcast %51 : vector<1x128xf32> to vector<8x128xf32>
    %c0_27 = arith.constant 0 : index
    %c0_28 = arith.constant 0 : index
    %c0_29 = arith.constant 0 : index
    %53 = vector.load %arg9[%c0_27, %c0_28, %c0_29] : memref<1x8x128xf32, #tpu.memory_space<vmem>>, vector<1x8x128xf32>
    %54 = vector.shape_cast %53 : vector<1x8x128xf32> to vector<8x128xf32>
    %55 = vector.shape_cast %52 : vector<8x128xf32> to vector<1x8x128xf32>
    tpu.vector_store %arg9[%c0_27, %c0_28, %c0_29], %55 {strides = array<i32>} : memref<1x8x128xf32, #tpu.memory_space<vmem>>, vector<1x8x128xf32>,
    return
  }
  func.func @transform_0(%arg0: i32) -> (i32, i32, i32) {
    %c0_i32 = arith.constant 0 : i32
    %c0_i32_0 = arith.constant 0 : i32
    %c0_i32_1 = arith.constant 0 : i32
    return %arg0, %c0_i32, %c0_i32_0 : i32, i32, i32
  }
  func.func @transform_1(%arg0: i32) -> (i32, i32) {
    %c0_i32 = arith.constant 0 : i32
    %c0_i32_0 = arith.constant 0 : i32
    %c0_i32_1 = arith.constant 0 : i32
    return %c0_i32, %c0_i32_0 : i32, i32
  }
  func.func @transform_2(%arg0: i32) -> (i32, i32) {
    %c0_i32 = arith.constant 0 : i32
    %c0_i32_0 = arith.constant 0 : i32
    %c0_i32_1 = arith.constant 0 : i32
    return %c0_i32, %c0_i32_0 : i32, i32
  }
  func.func @transform_3(%arg0: i32) -> (i32, i32) {
    %c0_i32 = arith.constant 0 : i32
    %c0_i32_0 = arith.constant 0 : i32
    %c0_i32_1 = arith.constant 0 : i32
    return %c0_i32, %c0_i32_0 : i32, i32
  }
  func.func @transform_4(%arg0: i32) -> (i32, i32) {
    %c0_i32 = arith.constant 0 : i32
    %c0_i32_0 = arith.constant 0 : i32
    %c0_i32_1 = arith.constant 0 : i32
    return %c0_i32, %c0_i32_0 : i32, i32
  }
  func.func @transform_5(%arg0: i32) -> (i32, i32) {
    %c0_i32 = arith.constant 0 : i32
    %c0_i32_0 = arith.constant 0 : i32
    %c0_i32_1 = arith.constant 0 : i32
    return %c0_i32, %c0_i32_0 : i32, i32
  }
  func.func @transform_6(%arg0: i32) -> (i32, i32) {
    %c0_i32 = arith.constant 0 : i32
    %c0_i32_0 = arith.constant 0 : i32
    %c0_i32_1 = arith.constant 0 : i32
    return %c0_i32, %c0_i32_0 : i32, i32
  }
  func.func @transform_7(%arg0: i32) -> (i32, i32) {
    %c0_i32 = arith.constant 0 : i32
    %c0_i32_0 = arith.constant 0 : i32
    %c0_i32_1 = arith.constant 0 : i32
    return %c0_i32, %c0_i32_0 : i32, i32
  }
  func.func @transform_8(%arg0: i32) -> (i32, i32, i32) {
    %c0_i32 = arith.constant 0 : i32
    %c0_i32_0 = arith.constant 0 : i32
    %c0_i32_1 = arith.constant 0 : i32
    return %arg0, %c0_i32, %c0_i32_0 : i32, i32, i32
  }
}

</mosaic_0001>

<llo_original>
// kernel: tpu_custom_call.1
$region0: #{tpu_custom_call.1}
  #allocation0 [shape = 'u32[]', space=smem, size = 0x4, offset = 0x4, fixed_abs, tag = 'smem constant byte address 0x4 - core index']
  #allocation1 [shape = 'u32[144,128]{1,0:T(1,128)}', space=vmem, size = 0x12000, scoped, tag = 'internal scratch']
  #allocation2 [shape = 'f32[1,1]{1,0:T(1,128)S(1)}', space=vmem, size = 0x200, scoped, tag = 'scoped memory for tpu_custom_call.1']
  %s0 = inlined_call_operand.vmem [shape: bf16[2,32,64], index: 0, kind: input, shape index: {}]
  %s1 = inlined_call_operand.vmem [shape: bf16[48,32], index: 1, kind: input, shape index: {}]
  %s2 = inlined_call_operand.vmem [shape: f32[48,1], index: 2, kind: input, shape index: {}]
  %s3 = inlined_call_operand.<no memory space> [shape: f32[1,1], index: 3, kind: input, shape index: {}]
  %s4 = inlined_call_operand.hbm [shape: bf16[32,128], index: 4, kind: input, shape index: {}]
  %s5 = inlined_call_operand.vmem [shape: f32[1,128], index: 5, kind: input, shape index: {}]
  %s6 = inlined_call_operand.vmem [shape: bf16[128,128], index: 6, kind: input, shape index: {}]
  %s7 = inlined_call_operand.vmem [shape: f32[1,128], index: 7, kind: input, shape index: {}]
  %s8 = inlined_call_operand.hbm [shape: f32[2,8,128], index: 8, kind: output, shape index: {}]
  %s9 = sld [smem:[#allocation0]]
  $region69: #{tpu_custom_call.1} parent=0
    _
  %s11 = ssub.s32 1, %s9
  %s12 = scalar_select 0, %s11, %s9
  %v13 = vstv %s3
  %14 = vst [vmem:[#allocation2] sm:$0x1] %v13
  $region1: #{tpu_custom_call.1} parent=0
    #allocation3 [shape = 'u8[8192]{0}', space=vmem, size = 0x2000, scoped, tag = 'input window, operand 4, single buffered']
    #allocation4 [shape = 's32[2]{0}', space=sflag, size = 0x8, scoped, tag = 'scoped memory for tpu_custom_call.1']
    #allocation5 [shape = 's32[2]{0}', space=sflag, size = 0x8, scoped, tag = 'scoped memory for tpu_custom_call.1']
    #allocation6 [shape = 'u8[8192]{0}', space=vmem, size = 0x2000, scoped, tag = 'output window, operand 0']
    %15 = vsyncpa [#allocation4], 0
    %16 = vsyncpa [#allocation5], 0
    %s17 = scalar_lea.sflag [#allocation5], 1
    %18 = vsyncpa %s17, 0
    loop: start=0, step=1, limit=4
    $region2: #{tpu_custom_call.1} parent=1 // loop_pre_header
      _
    $region3: #{tpu_custom_call.1} parent=1 // loop_header
      %s20 = sphi 0, %s24
      %p21 = scmp.ge.s32.totalorder %s20, 4
      %s30 = sphi 0, %s32
      %s33 = sphi 0, %s30
      %s34 = sphi 0, %s33
      %s50 = sphi 0, %s34
      %s54 = sphi 0, %s54
      %s56 = sphi 0, %s54
      %s57 = sphi 0, %s56
      %s71 = sphi 0, %s57
      %s75 = sphi 0, %s75
      %s77 = sphi 0, %s75
      %s78 = sphi 0, %s77
      %s92 = sphi 0, %s78
      %s96 = sphi 0, %s96
      %s98 = sphi 0, %s96
      %s99 = sphi 0, %s98
      %s113 = sphi 0, %s99
      %s117 = sphi 0, %s117
      %s119 = sphi 0, %s117
      %s120 = sphi 0, %s119
      %s134 = sphi 0, %s120
      %s138 = sphi 0, %s138
      %s140 = sphi 0, %s138
      %s141 = sphi 0, %s140
      %s155 = sphi 0, %s141
      %s159 = sphi 0, %s159
      %s161 = sphi 0, %s159
      %s162 = sphi 0, %s161
      %s176 = sphi 0, %s162
      %s180 = sphi 0, %s180
      %s182 = sphi 0, %s180
      %s183 = sphi 0, %s182
      %s197 = sphi 0, %s183
      %s203 = sphi 0, %s205
      %s206 = sphi 0, %s203
      %s207 = sphi 0, %s206
      %s223 = sphi 0, %s207
    $region4: #{tpu_custom_call.1} parent=1 // loop_header_branch
      %23 = sbr.rel (%p21) target = $region8
    $region5: #{tpu_custom_call.1} parent=1 // loop_body
      %s25 = ssub.s32 %s20, 1
      %s26 = ssub.s32 %s20, 2
      %s27 = sadd.s32 %s20, 1
      %s28 = ssub.s32 %s20, %s27
      %p29 = scmp.eq.s32.totalorder %s28, 0
      %s31 = sadd.s32 %s30, 1
      %s32 = scalar_select %p29, %s30, %s31
      %p35 = pneg %p29
      %p36 = scmp.eq.s32.totalorder %s20, 1
      %p37 = por %p35, %p36
      %p38 = scmp.ne.s32.totalorder %s30, %s33
      %p39 = scmp.eq.s32.totalorder %s20, 0
      %p40 = por %p38, %p39
      %p41 = scmp.ne.s32.totalorder %s30, %s33
      %p42 = scmp.eq.s32.totalorder %s25, 1
      %p43 = por %p41, %p42
      %p44 = scmp.ne.s32.totalorder %s33, %s34
      %p45 = scmp.eq.s32.totalorder %s25, 0
      %p46 = por %p44, %p45
      %p47 = scmp.ne.s32.totalorder %s33, %s34
      %p48 = scmp.eq.s32.totalorder %s26, 1
      %p49 = por %p47, %p48
      %p51 = scmp.ne.s32.totalorder %s34, %s50
      %p52 = scmp.eq.s32.totalorder %s26, 0
      %p53 = por %p51, %p52
      %s55 = sadd.s32 %s54, 1
      %p58 = scmp.eq.s32.totalorder %s20, 1
      %p59 = scmp.ne.s32.totalorder %s54, %s56
      %p60 = scmp.eq.s32.totalorder %s20, 0
      %p61 = por %p59, %p60
      %p62 = scmp.ne.s32.totalorder %s54, %s56
      %p63 = scmp.eq.s32.totalorder %s25, 1
      %p64 = por %p62, %p63
      %p65 = scmp.ne.s32.totalorder %s56, %s57
      %p66 = scmp.eq.s32.totalorder %s25, 0
      %p67 = por %p65, %p66
      %p68 = scmp.ne.s32.totalorder %s56, %s57
      %p69 = scmp.eq.s32.totalorder %s26, 1
      %p70 = por %p68, %p69
      %p72 = scmp.ne.s32.totalorder %s57, %s71
      %p73 = scmp.eq.s32.totalorder %s26, 0
      %p74 = por %p72, %p73
      %s76 = sadd.s32 %s75, 1
      %p79 = scmp.eq.s32.totalorder %s20, 1
      %p80 = scmp.ne.s32.totalorder %s75, %s77
      %p81 = scmp.eq.s32.totalorder %s20, 0
      %p82 = por %p80, %p81
      %p83 = scmp.ne.s32.totalorder %s75, %s77
      %p84 = scmp.eq.s32.totalorder %s25, 1
      %p85 = por %p83, %p84
      %p86 = scmp.ne.s32.totalorder %s77, %s78
      %p87 = scmp.eq.s32.totalorder %s25, 0
      %p88 = por %p86, %p87
      %p89 = scmp.ne.s32.totalorder %s77, %s78
      %p90 = scmp.eq.s32.totalorder %s26, 1
      %p91 = por %p89, %p90
      %p93 = scmp.ne.s32.totalorder %s78, %s92
      %p94 = scmp.eq.s32.totalorder %s26, 0
      %p95 = por %p93, %p94
      %s97 = sadd.s32 %s96, 1
      %p100 = scmp.eq.s32.totalorder %s20, 1
      %p101 = scmp.ne.s32.totalorder %s96, %s98
      %p102 = scmp.eq.s32.totalorder %s20, 0
      %p103 = por %p101, %p102
      %p104 = scmp.ne.s32.totalorder %s96, %s98
      %p105 = scmp.eq.s32.totalorder %s25, 1
      %p106 = por %p104, %p105
      %p107 = scmp.ne.s32.totalorder %s98, %s99
      %p108 = scmp.eq.s32.totalorder %s25, 0
      %p109 = por %p107, %p108
      %p110 = scmp.ne.s32.totalorder %s98, %s99
      %p111 = scmp.eq.s32.totalorder %s26, 1
      %p112 = por %p110, %p111
      %p114 = scmp.ne.s32.totalorder %s99, %s113
      %p115 = scmp.eq.s32.totalorder %s26, 0
      %p116 = por %p114, %p115
      %s118 = sadd.s32 %s117, 1
      %p121 = scmp.eq.s32.totalorder %s20, 1
      %p122 = scmp.ne.s32.totalorder %s117, %s119
      %p123 = scmp.eq.s32.totalorder %s20, 0
      %p124 = por %p122, %p123
      %p125 = scmp.ne.s32.totalorder %s117, %s119
      %p126 = scmp.eq.s32.totalorder %s25, 1
      %p127 = por %p125, %p126
      %p128 = scmp.ne.s32.totalorder %s119, %s120
      %p129 = scmp.eq.s32.totalorder %s25, 0
      %p130 = por %p128, %p129
      %p131 = scmp.ne.s32.totalorder %s119, %s120
      %p132 = scmp.eq.s32.totalorder %s26, 1
      %p133 = por %p131, %p132
      %p135 = scmp.ne.s32.totalorder %s120, %s134
      %p136 = scmp.eq.s32.totalorder %s26, 0
      %p137 = por %p135, %p136
      %s139 = sadd.s32 %s138, 1
      %p142 = scmp.eq.s32.totalorder %s20, 1
      %p143 = scmp.ne.s32.totalorder %s138, %s140
      %p144 = scmp.eq.s32.totalorder %s20, 0
      %p145 = por %p143, %p144
      %p146 = scmp.ne.s32.totalorder %s138, %s140
      %p147 = scmp.eq.s32.totalorder %s25, 1
      %p148 = por %p146, %p147
      %p149 = scmp.ne.s32.totalorder %s140, %s141
      %p150 = scmp.eq.s32.totalorder %s25, 0
      %p151 = por %p149, %p150
      %p152 = scmp.ne.s32.totalorder %s140, %s141
      %p153 = scmp.eq.s32.totalorder %s26, 1
      %p154 = por %p152, %p153
      %p156 = scmp.ne.s32.totalorder %s141, %s155
      %p157 = scmp.eq.s32.totalorder %s26, 0
      %p158 = por %p156, %p157
      %s160 = sadd.s32 %s159, 1
      %p163 = scmp.eq.s32.totalorder %s20, 1
      %p164 = scmp.ne.s32.totalorder %s159, %s161
      %p165 = scmp.eq.s32.totalorder %s20, 0
      %p166 = por %p164, %p165
      %p167 = scmp.ne.s32.totalorder %s159, %s161
      %p168 = scmp.eq.s32.totalorder %s25, 1
      %p169 = por %p167, %p168
      %p170 = scmp.ne.s32.totalorder %s161, %s162
      %p171 = scmp.eq.s32.totalorder %s25, 0
      %p172 = por %p170, %p171
      %p173 = scmp.ne.s32.totalorder %s161, %s162
      %p174 = scmp.eq.s32.totalorder %s26, 1
      %p175 = por %p173, %p174
      %p177 = scmp.ne.s32.totalorder %s162, %s176
      %p178 = scmp.eq.s32.totalorder %s26, 0
      %p179 = por %p177, %p178
      %s181 = sadd.s32 %s180, 1
      %p184 = scmp.eq.s32.totalorder %s20, 1
      %p185 = scmp.ne.s32.totalorder %s180, %s182
      %p186 = scmp.eq.s32.totalorder %s20, 0
      %p187 = por %p185, %p186
      %p188 = scmp.ne.s32.totalorder %s180, %s182
      %p189 = scmp.eq.s32.totalorder %s25, 1
      %p190 = por %p188, %p189
      %p191 = scmp.ne.s32.totalorder %s182, %s183
      %p192 = scmp.eq.s32.totalorder %s25, 0
      %p193 = por %p191, %p192
      %p194 = scmp.ne.s32.totalorder %s182, %s183
      %p195 = scmp.eq.s32.totalorder %s26, 1
      %p196 = por %p194, %p195
      %p198 = scmp.ne.s32.totalorder %s183, %s197
      %p199 = scmp.eq.s32.totalorder %s26, 0
      %p200 = por %p198, %p199
      %s201 = ssub.s32 %s20, %s27
      %p202 = scmp.eq.s32.totalorder %s201, 0
      %s204 = sadd.s32 %s203, 1
      %s205 = scalar_select %p202, %s203, %s204
      %p208 = pneg %p202
      %p209 = scmp.eq.s32.totalorder %s20, 1
      %p210 = por %p208, %p209
      %p211 = scmp.ne.s32.totalorder %s203, %s206
      %p212 = scmp.eq.s32.totalorder %s20, 0
      %p213 = por %p211, %p212
      %p214 = scmp.ne.s32.totalorder %s203, %s206
      %p215 = scmp.eq.s32.totalorder %s25, 1
      %p216 = por %p214, %p215
      %p217 = scmp.ne.s32.totalorder %s206, %s207
      %p218 = scmp.eq.s32.totalorder %s25, 0
      %p219 = por %p217, %p218
      %p220 = scmp.ne.s32.totalorder %s206, %s207
      %p221 = scmp.eq.s32.totalorder %s26, 1
      %p222 = por %p220, %p221
      %p224 = scmp.ne.s32.totalorder %s207, %s223
      %p225 = scmp.eq.s32.totalorder %s26, 0
      %p226 = por %p224, %p225
      %p227 = scmp.le.s32.totalorder 1, %s20
      %p228 = scmp.lt.s32.totalorder %s20, 3
      %p229 = pnand %p227, %p228
      %p230 = pneg %p229
      // Predicated region
      $region9: #{tpu_custom_call.1} parent=5 // pred_check
        _
      $region10: #{tpu_custom_call.1} parent=5 // pred_check_branch
        %232 = sbr.rel (%p229) target = $region12
      $region11: #{tpu_custom_call.1} parent=5 // pred_region
        %s233 = ssub.s32 %s20, 1
        // Predicated region
        $region13: #{tpu_custom_call.1} parent=11 // pred_check
          %p234 = pneg %p67
        $region14: #{tpu_custom_call.1} parent=11 // pred_check_branch
          %236 = sbr.rel (%p234) target = $region16
        $region15: #{tpu_custom_call.1} parent=11 // pred_region
          _
        $region16: #{tpu_custom_call.1} parent=11 // pred_fallthru
          _
        // Predicated region
        $region17: #{tpu_custom_call.1} parent=11 // pred_check
          %p237 = pneg %p88
        $region18: #{tpu_custom_call.1} parent=11 // pred_check_branch
          %239 = sbr.rel (%p237) target = $region20
        $region19: #{tpu_custom_call.1} parent=11 // pred_region
          _
        $region20: #{tpu_custom_call.1} parent=11 // pred_fallthru
          _
        // Predicated region
        $region21: #{tpu_custom_call.1} parent=11 // pred_check
          %p240 = pneg %p109
        $region22: #{tpu_custom_call.1} parent=11 // pred_check_branch
          %242 = sbr.rel (%p240) target = $region24
        $region23: #{tpu_custom_call.1} parent=11 // pred_region
          _
        $region24: #{tpu_custom_call.1} parent=11 // pred_fallthru
          _
        // Predicated region
        $region25: #{tpu_custom_call.1} parent=11 // pred_check
          %p243 = pneg %p130
        $region26: #{tpu_custom_call.1} parent=11 // pred_check_branch
          %245 = sbr.rel (%p243) target = $region28
        $region27: #{tpu_custom_call.1} parent=11 // pred_region
          %s247 = ssub.s32 256, 256
          %248 = vsyncadd [#allocation4], %s247
          %s249 = sshll.u32 [#allocation3], 4
          %s250 = int_to_ptr.vmem [resolvable:$true] %s249
          %255 = dma.hbm_to_vmem [thread:$0]  %s4, 256, %s250, [#allocation4], 64, 64, 4
        $region28: #{tpu_custom_call.1} parent=11 // pred_fallthru
          _
        // Predicated region
        $region29: #{tpu_custom_call.1} parent=11 // pred_check
          %p256 = pneg %p151
        $region30: #{tpu_custom_call.1} parent=11 // pred_check_branch
          %258 = sbr.rel (%p256) target = $region32
        $region31: #{tpu_custom_call.1} parent=11 // pred_region
          _
        $region32: #{tpu_custom_call.1} parent=11 // pred_fallthru
          _
        // Predicated region
        $region33: #{tpu_custom_call.1} parent=11 // pred_check
          %p259 = pneg %p172
        $region34: #{tpu_custom_call.1} parent=11 // pred_check_branch
          %261 = sbr.rel (%p259) target = $region36
        $region35: #{tpu_custom_call.1} parent=11 // pred_region
          _
        $region36: #{tpu_custom_call.1} parent=11 // pred_fallthru
          _
        // Predicated region
        $region37: #{tpu_custom_call.1} parent=11 // pred_check
          %p262 = pneg %p193
        $region38: #{tpu_custom_call.1} parent=11 // pred_check_branch
          %264 = sbr.rel (%p262) target = $region40
        $region39: #{tpu_custom_call.1} parent=11 // pred_region
          _
        $region40: #{tpu_custom_call.1} parent=11 // pred_fallthru
          _
      $region12: #{tpu_custom_call.1} parent=5 // pred_fallthru
        _
      %p265 = scmp.lt.s32.totalorder %s20, 2
      // Predicated region
      $region41: #{tpu_custom_call.1} parent=5 // pred_check
        %p266 = pneg %p265
      $region42: #{tpu_custom_call.1} parent=5 // pred_check_branch
        %268 = sbr.rel (%p266) target = $region44
      $region43: #{tpu_custom_call.1} parent=5 // pred_region
        // Predicated region
        $region45: #{tpu_custom_call.1} parent=43 // pred_check
          %p269 = pneg %p40
        $region46: #{tpu_custom_call.1} parent=43 // pred_check_branch
          %271 = sbr.rel (%p269) target = $region48
        $region47: #{tpu_custom_call.1} parent=43 // pred_region
          %p272 = scmp.lt.s32.totalorder %s20, 1
          %s273 = scalar_select %p272, %s20, 1
          %s274 = smul.addr %s273, 4
          %s275 = smul.addr %s274, 4
          %s276 = scalar_lea.vmem %s0, %s275
        $region48: #{tpu_custom_call.1} parent=43 // pred_fallthru
          _
      $region44: #{tpu_custom_call.1} parent=5 // pred_fallthru
        _
      %p277 = scmp.le.s32.totalorder 1, %s20
      %p278 = scmp.lt.s32.totalorder %s20, 3
      %p279 = pnand %p277, %p278
      %p280 = pneg %p279
      // Predicated region
      $region49: #{tpu_custom_call.1} parent=5 // pred_check
        _
      $region50: #{tpu_custom_call.1} parent=5 // pred_check_branch
        %282 = sbr.rel (%p279) target = $region52
      $region51: #{tpu_custom_call.1} parent=5 // pred_region
        %s283 = ssub.s32 %s20, 1
        // Predicated region
        $region53: #{tpu_custom_call.1} parent=51 // pred_check
          %p284 = pneg %p130
        $region54: #{tpu_custom_call.1} parent=51 // pred_check_branch
          %286 = sbr.rel (%p284) target = $region56
        $region55: #{tpu_custom_call.1} parent=51 // pred_region
          %287 = dma.done [#allocation4], 256
        $region56: #{tpu_custom_call.1} parent=51 // pred_fallthru
          _
        %p288 = scmp.lt.s32.totalorder %s25, 1
        %s289 = scalar_select %p288, %s25, 1
        %s290 = smul.addr %s289, 4
        %s291 = smul.addr %s290, 4
        %s292 = scalar_lea.vmem %s0, %s291
        %p293 = pneg %p46
        %p294 = pneg %p43
        %p295 = pneg %p67
        %p296 = pneg %p64
        %p297 = pneg %p88
        %p298 = pneg %p85
        %p299 = pneg %p109
        %p300 = pneg %p106
        %p301 = pneg %p130
        %p302 = pneg %p127
        %p303 = pneg %p151
        %p304 = pneg %p148
        %p305 = pneg %p172
        %p306 = pneg %p169
        %p307 = pneg %p193
        %p308 = pneg %p190
        %p309 = pneg %p219
        %p310 = pneg %p216
        %s311 = sand.u32 %s206, 1
        %s312 = scalar_lea.sflag [#allocation5], %s311
        %s313 = sand.u32 %s206, 1
        %s314 = smul.addr %s313, 8
        %s315 = scalar_lea.vmem [#allocation6], %s314
        %p316 = scmp.lt.s32.totalorder %s25, 1
        %s317 = scalar_select %p316, %s25, 1
        %s318 = smul.addr %s317, 4
        %s319 = smul.addr %s318, 4
        %s320 = scalar_lea.vmem %s0, %s319
        %v322 = vld [vmem:[%s320] sm:$0xf]
        %v323 = vld [vmem:[%s320 + $0x4] sm:$0xf]
        %v324 = vld [vmem:[%s320 + $0x8] sm:$0xf]
        %v325 = vld [vmem:[%s320 + $0xc] sm:$0xf]
        %v326 = vld [vmem:[%s1] sm:$0xf]
        %v327 = vld [vmem:[%s1 + $0x4] sm:$0xf]
        %v328 = vld [vmem:[%s1 + $0x8] sm:$0xf]
        %v329 = vld [vmem:[%s1 + $0xc] sm:$0xf]
        %v330 = vld [vmem:[%s1 + $0x10] sm:$0xf]
        %v331 = vld [vmem:[%s1 + $0x14] sm:$0xf]
        %v332 = vld [vmem:[%s2] sm:$0xff]
        %v333 = vld [vmem:[%s2 + $0x8] sm:$0xff]
        %v334 = vld [vmem:[%s2 + $0x10] sm:$0xff]
        %v335 = vld [vmem:[%s2 + $0x18] sm:$0xff]
        %v336 = vld [vmem:[%s2 + $0x20] sm:$0xff]
        %v337 = vld [vmem:[%s2 + $0x28] sm:$0xff]
        %339 = vset.pattern.permute.xlu0 0
        %340 = vperm.xlu0 %339, %v332
        %v341 = vpop.permute.xlu0 %340
        %344 = vset.pattern.permute.xlu0 0
        %345 = vperm.xlu0 %344, %v333
        %v346 = vpop.permute.xlu0 %345
        %349 = vset.pattern.permute.xlu0 0
        %350 = vperm.xlu0 %349, %v334
        %v351 = vpop.permute.xlu0 %350
        %354 = vset.pattern.permute.xlu0 0
        %355 = vperm.xlu0 %354, %v335
        %v356 = vpop.permute.xlu0 %355
        %359 = vset.pattern.permute.xlu0 0
        %360 = vperm.xlu0 %359, %v336
        %v361 = vpop.permute.xlu0 %360
        %364 = vset.pattern.permute.xlu0 0
        %365 = vperm.xlu0 %364, %v337
        %v366 = vpop.permute.xlu0 %365
        %v374 = vunpack.c.l.b16 %v326
        %v375 = vunpack.c.l.b16 %v327
        %v376 = vunpack.c.l.b16 %v328
        %v377 = vunpack.c.l.b16 %v329
        %v378 = vunpack.c.l.b16 %v330
        %v379 = vunpack.c.l.b16 %v331
        %v380 = vpack.c.b16 %v375, %v374
        %v381 = vpack.c.b16 %v377, %v376
        %v382 = vpack.c.b16 %v379, %v378
        %v387 = vunpack.c.l.b16 %v322
        %v388 = vunpack.c.l.b16 %v323
        %v389 = vunpack.c.l.b16 %v324
        %v390 = vunpack.c.l.b16 %v325
        %v391 = vpack.c.b16 %v388, %v387
        %v392 = vpack.c.b16 %v390, %v389
        %vm395 = vcmask 261120
        %v397 = vsel %vm395, %v380, 0
        %v400 = vsel %vm395, %v381, 0
        %v403 = vsel %vm395, %v382, 0
        %405 = vmatprep.subr.bf16.mxu0 0
        %406 = vmatpush1.bf16.msra.mxu0 0
        %407 = vmatprep.subr.bf16.mxu0 0
        %408 = vmatpush1.bf16.msra.mxu0 0
        %409 = vmatprep.subr.bf16.mxu0 0
        %410 = vmatpush1.bf16.msra.mxu0 0
        %411 = vmatprep.subr.bf16.mxu0 0
        %412 = vmatpush1.bf16.msra.mxu0 0
        %413 = vmatprep.subr.bf16.mxu0 0
        %414 = vmatpush1.bf16.msra.mxu0 0
        %415 = vmatprep.subr.bf16.mxu0 0
        %416 = vmatpush1.bf16.msra.mxu0 0
        %417 = vmatprep.subr.bf16.mxu0 0
        %418 = vmatpush1.bf16.msra.mxu0 %v392
        %419 = vmatprep.subr.bf16.mxu0 0
        %420 = vmatpush1.bf16.msra.mxu0 %v391
        %421 = vmatprep.subr.bf16.mxu0 0
        %422 = vmatpush2.bf16.msra.mxu0 0
        %423 = vmatprep.subr.bf16.mxu0 0
        %424 = vmatpush2.bf16.msra.mxu0 0
        %425 = vmatprep.subr.bf16.mxu0 0
        %426 = vmatpush2.bf16.msra.mxu0 0
        %427 = vmatprep.subr.bf16.mxu0 0
        %428 = vmatpush2.bf16.msra.mxu0 0
        %429 = vmatprep.subr.bf16.mxu0 0
        %430 = vmatpush2.bf16.msra.mxu0 0
        %431 = vmatprep.subr.bf16.mxu0 0
        %432 = vmatpush2.bf16.msra.mxu0 0
        %433 = vmatprep.subr.bf16.mxu0 0
        %434 = vmatpush2.bf16.msra.mxu0 0
        %435 = vmatprep.subr.bf16.mxu0 0
        %436 = vmatpush2.bf16.msra.mxu0 0
        %437 = vmatprep.mubr.bf16.mxu0 0
        %438 = vmatmul.mubr.bf16.gmra.mxu0 %v397
        %v439 = vpop.f32.mrf.mxu0
        %v440 = vadd.f32 %v341, %v439
        %v441 = vpop.f32.mrf.mxu0
        %v442 = vpop.f32.mrf.mxu0
        %v443 = vadd.f32 %v346, %v442
        %v444 = vpop.f32.mrf.mxu0
        %445 = vmatprep.mubr.bf16.mxu0 0
        %446 = vmatmul.mubr.bf16.gmra.mxu0 %v400
        %v447 = vpop.f32.mrf.mxu0
        %v448 = vadd.f32 %v351, %v447
        %v449 = vpop.f32.mrf.mxu0
        %v450 = vpop.f32.mrf.mxu0
        %v451 = vadd.f32 %v356, %v450
        %v452 = vpop.f32.mrf.mxu0
        %453 = vmatprep.mubr.bf16.mxu0 0
        %454 = vmatmul.mubr.bf16.gmra.mxu0 %v403
        %v455 = vpop.f32.mrf.mxu0
        %v456 = vadd.f32 %v361, %v455
        %v457 = vpop.f32.mrf.mxu0
        %v458 = vpop.f32.mrf.mxu0
        %v459 = vadd.f32 %v366, %v458
        %v460 = vpop.f32.mrf.mxu0
        %461 = vdwg.mxu0
        %v462 = vpack.c.bf16 %v440, %v440
        %v463 = vpack.c.bf16 %v443, %v443
        %464 = vxpose.xlu0.c.b16.start [1/8] %v462, 128
        %465 = vxpose.xlu0.c.b16.cont [2/8] 0, 128
        %466 = vxpose.xlu0.c.b16.cont [3/8] 0, 128
        %467 = vxpose.xlu0.c.b16.cont [4/8] 0, 128
        %468 = vxpose.xlu0.c.b16.cont [5/8] 0, 128
        %469 = vxpose.xlu0.c.b16.cont [6/8] 0, 128
        %470 = vxpose.xlu0.c.b16.cont [7/8] 0, 128
        %471 = vxpose.xlu0.c.b16.end [8/8] 0, 128
        %v472 = vpop.trf.xlu0
        %v473 = vpop.trf.xlu0
        %v474 = vpop.trf.xlu0
        %v475 = vpop.trf.xlu0
        %v476 = vpop.trf.xlu0
        %v477 = vpop.trf.xlu0
        %v478 = vpop.trf.xlu0
        %v479 = vpop.trf.xlu0
        %vm480 = vcmask 64512
        %v482 = vsel %vm480, %v472, 0
        %v485 = vsel %vm480, %v473, 0
        %v488 = vsel %vm480, %v474, 0
        %v491 = vsel %vm480, %v475, 0
        %vm493 = vcmask 1043456
        %v495 = vsel %vm493, %v463, 0
        %497 = vmatprep.subr.bf16.mxu0 0
        %498 = vmatpush1.bf16.msra.mxu0 0
        %499 = vmatprep.subr.bf16.mxu0 0
        %500 = vmatpush1.bf16.msra.mxu0 0
        %501 = vmatprep.subr.bf16.mxu0 0
        %502 = vmatpush1.bf16.msra.mxu0 0
        %503 = vmatprep.subr.bf16.mxu0 0
        %504 = vmatpush1.bf16.msra.mxu0 0
        %505 = vmatprep.subr.bf16.mxu0 0
        %506 = vmatpush1.bf16.msra.mxu0 0
        %507 = vmatprep.subr.bf16.mxu0 0
        %508 = vmatpush1.bf16.msra.mxu0 0
        %509 = vmatprep.subr.bf16.mxu0 0
        %510 = vmatpush1.bf16.msra.mxu0 0
        %511 = vmatprep.subr.bf16.mxu0 0
        %512 = vmatpush1.bf16.msra.mxu0 %v495
        %513 = vmatprep.subr.bf16.mxu0 0
        %514 = vmatpush2.bf16.msra.mxu0 0
        %515 = vmatprep.subr.bf16.mxu0 0
        %516 = vmatpush2.bf16.msra.mxu0 0
        %517 = vmatprep.subr.bf16.mxu0 0
        %518 = vmatpush2.bf16.msra.mxu0 0
        %519 = vmatprep.subr.bf16.mxu0 0
        %520 = vmatpush2.bf16.msra.mxu0 0
        %521 = vmatprep.subr.bf16.mxu0 0
        %522 = vmatpush2.bf16.msra.mxu0 0
        %523 = vmatprep.subr.bf16.mxu0 0
        %524 = vmatpush2.bf16.msra.mxu0 0
        %525 = vmatprep.subr.bf16.mxu0 0
        %526 = vmatpush2.bf16.msra.mxu0 0
        %527 = vmatprep.subr.bf16.mxu0 0
        %528 = vmatpush2.bf16.msra.mxu0 0
        %529 = vmatprep.mubr.bf16.mxu0 0
        %530 = vmatmul.mubr.bf16.gmra.mxu0 %v482
        %v531 = vpop.f32.mrf.mxu0
        %v532 = vadd.f32 0.0, %v531
        %v533 = vpop.f32.mrf.mxu0
        %v534 = vpop.f32.mrf.mxu0
        %v535 = vadd.f32 0.0, %v534
        %v536 = vpop.f32.mrf.mxu0
        %537 = vmatprep.mubr.bf16.mxu0 0
        %538 = vmatmul.mubr.bf16.gmra.mxu0 %v485
        %v539 = vpop.f32.mrf.mxu0
        %v540 = vadd.f32 0.0, %v539
        %v541 = vpop.f32.mrf.mxu0
        %v542 = vpop.f32.mrf.mxu0
        %v543 = vadd.f32 0.0, %v542
        %v544 = vpop.f32.mrf.mxu0
        %545 = vmatprep.mubr.bf16.mxu0 0
        %546 = vmatmul.mubr.bf16.gmra.mxu0 %v488
        %v547 = vpop.f32.mrf.mxu0
        %v548 = vadd.f32 0.0, %v547
        %v549 = vpop.f32.mrf.mxu0
        %v550 = vpop.f32.mrf.mxu0
        %v551 = vadd.f32 0.0, %v550
        %v552 = vpop.f32.mrf.mxu0
        %553 = vmatprep.mubr.bf16.mxu0 0
        %554 = vmatmul.mubr.bf16.gmra.mxu0 %v491
        %v555 = vpop.f32.mrf.mxu0
        %v556 = vadd.f32 0.0, %v555
        %v557 = vpop.f32.mrf.mxu0
        %v558 = vpop.f32.mrf.mxu0
        %v559 = vadd.f32 0.0, %v558
        %v560 = vpop.f32.mrf.mxu0
        %561 = vdwg.mxu0
        %vm562 = vcmask 523264
        %v563 = vsel %vm562, %v532, -inf
        %564 = vmax.xlane.f32.xlu0 %v563
        %v565 = vpop.xlane.xlu0 %564
        %v566 = vsel %vm562, %v535, -inf
        %567 = vmax.xlane.f32.xlu0 %v566
        %v568 = vpop.xlane.xlu0 %567
        %v569 = vsel %vm562, %v540, -inf
        %570 = vmax.xlane.f32.xlu0 %v569
        %v571 = vpop.xlane.xlu0 %570
        %v572 = vsel %vm562, %v543, -inf
        %573 = vmax.xlane.f32.xlu0 %v572
        %v574 = vpop.xlane.xlu0 %573
        %v575 = vsel %vm562, %v548, -inf
        %576 = vmax.xlane.f32.xlu0 %v575
        %v577 = vpop.xlane.xlu0 %576
        %v578 = vsel %vm562, %v551, -inf
        %579 = vmax.xlane.f32.xlu0 %v578
        %v580 = vpop.xlane.xlu0 %579
        %v581 = vsel %vm562, %v556, -inf
        %582 = vmax.xlane.f32.xlu0 %v581
        %v583 = vpop.xlane.xlu0 %582
        %v584 = vsel %vm562, %v559, -inf
        %585 = vmax.xlane.f32.xlu0 %v584
        %v586 = vpop.xlane.xlu0 %585
        %v587 = vsub.f32 %v532, %v565
        %v588 = vsub.f32 %v535, %v568
        %v589 = vsub.f32 %v540, %v571
        %v590 = vsub.f32 %v543, %v574
        %v591 = vsub.f32 %v548, %v577
        %v592 = vsub.f32 %v551, %v580
        %v593 = vsub.f32 %v556, %v583
        %v594 = vsub.f32 %v559, %v586
        %v595 = vmul.f32 %v587, 1.442695
        %v596 = vpow.pop %v595
        %v597 = vmul.f32 %v588, 1.442695
        %v598 = vpow.pop %v597
        %v599 = vmul.f32 %v589, 1.442695
        %v600 = vpow.pop %v599
        %v601 = vmul.f32 %v590, 1.442695
        %v602 = vpow.pop %v601
        %v603 = vmul.f32 %v591, 1.442695
        %v604 = vpow.pop %v603
        %v605 = vmul.f32 %v592, 1.442695
        %v606 = vpow.pop %v605
        %v607 = vmul.f32 %v593, 1.442695
        %v608 = vpow.pop %v607
        %v609 = vmul.f32 %v594, 1.442695
        %v610 = vpow.pop %v609
        %v611 = vsel %vm562, %v596, 0.0
        %612 = vadd.xlane.f32.xlu0 %v611
        %v613 = vpop.xlane.xlu0 %612
        %v614 = vsel %vm562, %v598, 0.0
        %615 = vadd.xlane.f32.xlu0 %v614
        %v616 = vpop.xlane.xlu0 %615
        %v617 = vsel %vm562, %v600, 0.0
        %618 = vadd.xlane.f32.xlu0 %v617
        %v619 = vpop.xlane.xlu0 %618
        %v620 = vsel %vm562, %v602, 0.0
        %621 = vadd.xlane.f32.xlu0 %v620
        %v622 = vpop.xlane.xlu0 %621
        %v623 = vsel %vm562, %v604, 0.0
        %624 = vadd.xlane.f32.xlu0 %v623
        %v625 = vpop.xlane.xlu0 %624
        %v626 = vsel %vm562, %v606, 0.0
        %627 = vadd.xlane.f32.xlu0 %v626
        %v628 = vpop.xlane.xlu0 %627
        %v629 = vsel %vm562, %v608, 0.0
        %630 = vadd.xlane.f32.xlu0 %v629
        %v631 = vpop.xlane.xlu0 %630
        %v632 = vsel %vm562, %v610, 0.0
        %633 = vadd.xlane.f32.xlu0 %v632
        %v634 = vpop.xlane.xlu0 %633
        %v635 = vrcp.pop %v613
        %v636 = vmul.f32 %v596, %v635
        %v637 = vrcp.pop %v616
        %v638 = vmul.f32 %v598, %v637
        %v639 = vrcp.pop %v619
        %v640 = vmul.f32 %v600, %v639
        %v641 = vrcp.pop %v622
        %v642 = vmul.f32 %v602, %v641
        %v643 = vrcp.pop %v625
        %v644 = vmul.f32 %v604, %v643
        %v645 = vrcp.pop %v628
        %v646 = vmul.f32 %v606, %v645
        %v647 = vrcp.pop %v631
        %v648 = vmul.f32 %v608, %v647
        %v649 = vrcp.pop %v634
        %v650 = vmul.f32 %v610, %v649
        %v651 = vsel %vm562, %v636, 0.0
        %v652 = vsel %vm562, %v638, 0.0
        %v653 = vadd.f32 %v651, %v652
        %v654 = vsel %vm562, %v640, 0.0
        %v655 = vadd.f32 %v653, %v654
        %v656 = vsel %vm562, %v642, 0.0
        %v657 = vadd.f32 %v655, %v656
        %v658 = vsel %vm562, %v644, 0.0
        %v659 = vadd.f32 %v657, %v658
        %v660 = vsel %vm562, %v646, 0.0
        %v661 = vadd.f32 %v659, %v660
        %v662 = vsel %vm562, %v648, 0.0
        %v663 = vadd.f32 %v661, %v662
        %v664 = vsel %vm562, %v650, 0.0
        %v665 = vadd.f32 %v663, %v664
        %v666 = vrot.slane %v665, 4
        %v667 = vadd.f32 %v665, %v666
        %v668 = vrot.slane %v667, 2
        %v669 = vadd.f32 %v667, %v668
        %v670 = vrot.slane %v669, 1
        %v671 = vadd.f32 %v669, %v670
        %v672 = vrcp.pop 64.0
        %v673 = vmul.f32 %v671, %v672
        %v674 = vmul.f32 %v448, %v673
        %v675 = vmul.f32 %v451, %v673
        %v676 = vmul.f32 %v456, %v673
        %v677 = vmul.f32 %v459, %v673
        %v678 = vsel %vm562, %v674, 0.0
        %679 = vadd.xlane.f32.xlu0 %v678
        %v680 = vpop.xlane.xlu0 %679
        %v681 = vsel %vm562, %v675, 0.0
        %682 = vadd.xlane.f32.xlu0 %v681
        %v683 = vpop.xlane.xlu0 %682
        %v684 = vsel %vm562, %v676, 0.0
        %685 = vadd.xlane.f32.xlu0 %v684
        %v686 = vpop.xlane.xlu0 %685
        %v687 = vsel %vm562, %v677, 0.0
        %688 = vadd.xlane.f32.xlu0 %v687
        %v689 = vpop.xlane.xlu0 %688
        %v690 = vunpack.c.l.bf16 %v322
        %v691 = vunpack.c.l.bf16 %v323
        %v692 = vunpack.c.l.bf16 %v324
        %v693 = vunpack.c.l.bf16 %v325
        %v694 = vsel %vm562, %v690, 0.0
        %695 = vadd.xlane.f32.xlu0 %v694
        %v696 = vpop.xlane.xlu0 %695
        %v697 = vsel %vm562, %v691, 0.0
        %698 = vadd.xlane.f32.xlu0 %v697
        %v699 = vpop.xlane.xlu0 %698
        %v700 = vsel %vm562, %v692, 0.0
        %701 = vadd.xlane.f32.xlu0 %v700
        %v702 = vpop.xlane.xlu0 %701
        %v703 = vsel %vm562, %v693, 0.0
        %704 = vadd.xlane.f32.xlu0 %v703
        %v705 = vpop.xlane.xlu0 %704
        %v706 = vmul.f32 %v696, %v672
        %v707 = vmul.f32 %v699, %v672
        %v708 = vmul.f32 %v702, %v672
        %v709 = vmul.f32 %v705, %v672
        %v710 = vld [vmem:[#allocation2] sm:$0x1]
        %v712 = vlaneseq
        %v713 = vshrl.u32 %v712, 7
        %v714 = vsub.s32 0, %v713
        %v715 = vrot.slane %v710, %v714
        %v717 = vmul.f32 %v715, %v680
        %v718 = vmul.f32 %v715, %v683
        %v719 = vmul.f32 %v715, %v686
        %v720 = vmul.f32 %v715, %v689
        %v721 = vadd.f32 %v717, %v706
        %v722 = vadd.f32 %v718, %v707
        %v723 = vadd.f32 %v719, %v708
        %v724 = vadd.f32 %v720, %v709
        %v725 = vpack.c.bf16 %v722, %v721
        %v726 = vpack.c.bf16 %v724, %v723
        %v727 = vld [vmem:[#allocation3] sm:$0xf]
        %v728 = vld [vmem:[#allocation3 + $0x4] sm:$0xf]
        %v729 = vld [vmem:[#allocation3 + $0x8] sm:$0xf]
        %v730 = vld [vmem:[#allocation3 + $0xc] sm:$0xf]
        %v731 = vld [vmem:[%s5] sm:$0x1]
        %732 = vxpose.xlu0.c.b16.start [1/8] %v725, 128
        %733 = vxpose.xlu0.c.b16.cont [2/8] %v726, 128
        %734 = vxpose.xlu0.c.b16.cont [3/8] 0, 128
        %735 = vxpose.xlu0.c.b16.cont [4/8] 0, 128
        %736 = vxpose.xlu0.c.b16.cont [5/8] 0, 128
        %737 = vxpose.xlu0.c.b16.cont [6/8] 0, 128
        %738 = vxpose.xlu0.c.b16.cont [7/8] 0, 128
        %739 = vxpose.xlu0.c.b16.end [8/8] 0, 128
        %v740 = vpop.trf.xlu0
        %v741 = vpop.trf.xlu0
        %v742 = vpop.trf.xlu0
        %v743 = vpop.trf.xlu0
        %v744 = vpop.trf.xlu0
        %v745 = vpop.trf.xlu0
        %v746 = vpop.trf.xlu0
        %v747 = vpop.trf.xlu0
        %v752 = vunpack.c.l.b16 %v727
        %v753 = vunpack.c.l.b16 %v728
        %v754 = vunpack.c.l.b16 %v729
        %v755 = vunpack.c.l.b16 %v730
        %v756 = vpack.c.b16 %v753, %v752
        %v757 = vpack.c.b16 %v755, %v754
        %v761 = vsel %vm395, %v740, 0
        %763 = vmatprep.subr.bf16.mxu0 0
        %764 = vmatpush1.bf16.msra.mxu0 0
        %765 = vmatprep.subr.bf16.mxu0 0
        %766 = vmatpush1.bf16.msra.mxu0 0
        %767 = vmatprep.subr.bf16.mxu0 0
        %768 = vmatpush1.bf16.msra.mxu0 0
        %769 = vmatprep.subr.bf16.mxu0 0
        %770 = vmatpush1.bf16.msra.mxu0 0
        %771 = vmatprep.subr.bf16.mxu0 0
        %772 = vmatpush1.bf16.msra.mxu0 0
        %773 = vmatprep.subr.bf16.mxu0 0
        %774 = vmatpush1.bf16.msra.mxu0 0
        %775 = vmatprep.subr.bf16.mxu0 0
        %776 = vmatpush1.bf16.msra.mxu0 %v757
        %777 = vmatprep.subr.bf16.mxu0 0
        %778 = vmatpush1.bf16.msra.mxu0 %v756
        %779 = vmatprep.subr.bf16.mxu0 0
        %780 = vmatpush2.bf16.msra.mxu0 0
        %781 = vmatprep.subr.bf16.mxu0 0
        %782 = vmatpush2.bf16.msra.mxu0 0
        %783 = vmatprep.subr.bf16.mxu0 0
        %784 = vmatpush2.bf16.msra.mxu0 0
        %785 = vmatprep.subr.bf16.mxu0 0
        %786 = vmatpush2.bf16.msra.mxu0 0
        %787 = vmatprep.subr.bf16.mxu0 0
        %788 = vmatpush2.bf16.msra.mxu0 0
        %789 = vmatprep.subr.bf16.mxu0 0
        %790 = vmatpush2.bf16.msra.mxu0 0
        %791 = vmatprep.subr.bf16.mxu0 0
        %792 = vmatpush2.bf16.msra.mxu0 0
        %793 = vmatprep.subr.bf16.mxu0 0
        %794 = vmatpush2.bf16.msra.mxu0 0
        %795 = vmatprep.mubr.bf16.mxu0 0
        %796 = vmatmul.mubr.bf16.gmra.mxu0 %v761
        %v797 = vpop.f32.mrf.mxu0
        %v798 = vadd.f32 %v731, %v797
        %v799 = vpop.f32.mrf.mxu0
        %v800 = vpop.f32.mrf.mxu0
        %v801 = vpop.f32.mrf.mxu0
        %802 = vdwg.mxu0
        %v803 = vpack.c.bf16 %v798, %v798
        %v804 = vld [vmem:[%s6] sm:$0xf]
        %v805 = vld [vmem:[%s6 + $0x4] sm:$0xf]
        %v806 = vld [vmem:[%s6 + $0x8] sm:$0xf]
        %v807 = vld [vmem:[%s6 + $0xc] sm:$0xf]
        %v808 = vld [vmem:[%s6 + $0x10] sm:$0xf]
        %v809 = vld [vmem:[%s6 + $0x14] sm:$0xf]
        %v810 = vld [vmem:[%s6 + $0x18] sm:$0xf]
        %v811 = vld [vmem:[%s6 + $0x1c] sm:$0xf]
        %v812 = vld [vmem:[%s6 + $0x20] sm:$0xf]
        %v813 = vld [vmem:[%s6 + $0x24] sm:$0xf]
        %v814 = vld [vmem:[%s6 + $0x28] sm:$0xf]
        %v815 = vld [vmem:[%s6 + $0x2c] sm:$0xf]
        %v816 = vld [vmem:[%s6 + $0x30] sm:$0xf]
        %v817 = vld [vmem:[%s6 + $0x34] sm:$0xf]
        %v818 = vld [vmem:[%s6 + $0x38] sm:$0xf]
        %v819 = vld [vmem:[%s6 + $0x3c] sm:$0xf]
        %v820 = vld [vmem:[%s7] sm:$0x1]
        %v837 = vunpack.c.l.b16 %v804
        %v838 = vunpack.c.l.b16 %v805
        %v839 = vunpack.c.l.b16 %v806
        %v840 = vunpack.c.l.b16 %v807
        %v841 = vunpack.c.l.b16 %v808
        %v842 = vunpack.c.l.b16 %v809
        %v843 = vunpack.c.l.b16 %v810
        %v844 = vunpack.c.l.b16 %v811
        %v845 = vunpack.c.l.b16 %v812
        %v846 = vunpack.c.l.b16 %v813
        %v847 = vunpack.c.l.b16 %v814
        %v848 = vunpack.c.l.b16 %v815
        %v849 = vunpack.c.l.b16 %v816
        %v850 = vunpack.c.l.b16 %v817
        %v851 = vunpack.c.l.b16 %v818
        %v852 = vunpack.c.l.b16 %v819
        %v853 = vpack.c.b16 %v838, %v837
        %v854 = vpack.c.b16 %v840, %v839
        %v855 = vpack.c.b16 %v842, %v841
        %v856 = vpack.c.b16 %v844, %v843
        %v857 = vpack.c.b16 %v846, %v845
        %v858 = vpack.c.b16 %v848, %v847
        %v859 = vpack.c.b16 %v850, %v849
        %v860 = vpack.c.b16 %v852, %v851
        %869 = vmatprep.subr.bf16.mxu0 0
        %870 = vmatpush1.bf16.msra.mxu0 %v860
        %871 = vmatprep.subr.bf16.mxu0 0
        %872 = vmatpush1.bf16.msra.mxu0 %v859
        %873 = vmatprep.subr.bf16.mxu0 0
        %874 = vmatpush1.bf16.msra.mxu0 %v858
        %875 = vmatprep.subr.bf16.mxu0 0
        %876 = vmatpush1.bf16.msra.mxu0 %v857
        %877 = vmatprep.subr.bf16.mxu0 0
        %878 = vmatpush1.bf16.msra.mxu0 %v856
        %879 = vmatprep.subr.bf16.mxu0 0
        %880 = vmatpush1.bf16.msra.mxu0 %v855
        %881 = vmatprep.subr.bf16.mxu0 0
        %882 = vmatpush1.bf16.msra.mxu0 %v854
        %883 = vmatprep.subr.bf16.mxu0 0
        %884 = vmatpush1.bf16.msra.mxu0 %v853
        %885 = vmatprep.subr.bf16.mxu0 0
        %886 = vmatpush2.bf16.msra.mxu0 0
        %887 = vmatprep.subr.bf16.mxu0 0
        %888 = vmatpush2.bf16.msra.mxu0 0
        %889 = vmatprep.subr.bf16.mxu0 0
        %890 = vmatpush2.bf16.msra.mxu0 0
        %891 = vmatprep.subr.bf16.mxu0 0
        %892 = vmatpush2.bf16.msra.mxu0 0
        %893 = vmatprep.subr.bf16.mxu0 0
        %894 = vmatpush2.bf16.msra.mxu0 0
        %895 = vmatprep.subr.bf16.mxu0 0
        %896 = vmatpush2.bf16.msra.mxu0 0
        %897 = vmatprep.subr.bf16.mxu0 0
        %898 = vmatpush2.bf16.msra.mxu0 0
        %899 = vmatprep.subr.bf16.mxu0 0
        %900 = vmatpush2.bf16.msra.mxu0 0
        %901 = vmatprep.mubr.bf16.mxu0 0
        %902 = vmatmul.mubr.bf16.gmra.mxu0 %v803
        %v903 = vpop.f32.mrf.mxu0
        %v904 = vadd.f32 %v820, %v903
        %v905 = vpop.f32.mrf.mxu0
        %v906 = vpop.f32.mrf.mxu0
        %v907 = vpop.f32.mrf.mxu0
        %908 = vdwg.mxu0
        %v909 = vmax.f32 %v904, 0.0
        %v910 = vlaneseq
        %v911 = vshrl.u32 %v910, 7
        %v912 = vsub.s32 0, %v911
        %v913 = vrot.slane %v909, %v912
        %914 = vst [vmem:[%s315] sm:$0xff] %v913
        %s915 = sand.u32 %s206, 1
        %s916 = scalar_lea.sflag [#allocation5], %s915
        %s917 = sand.u32 %s206, 1
        %s918 = smul.addr %s917, 8
        %s919 = scalar_lea.vmem [#allocation6], %s918
        // Predicated region
        $region57: #{tpu_custom_call.1} parent=51 // pred_check
          %p920 = pneg %p216
        $region58: #{tpu_custom_call.1} parent=51 // pred_check_branch
          %922 = sbr.rel (%p920) target = $region60
        $region59: #{tpu_custom_call.1} parent=51 // pred_region
          %s924 = ssub.s32 128, 128
          %925 = vsyncadd %s916, %s924
          %s926 = smul.addr %s25, 128
          %s927 = scalar_lea.hbm %s8, %s926
          %s929 = sshll.u32 %s919, 4
          %s930 = int_to_ptr.vmem [resolvable:$true] %s929
          %932 = dma.vmem_to_hbm [thread:$0]  %s930, 128, %s927, %s916
        $region60: #{tpu_custom_call.1} parent=51 // pred_fallthru
          _
      $region52: #{tpu_custom_call.1} parent=5 // pred_fallthru
        _
      %p933 = scmp.le.s32.totalorder 2, %s20
      // Predicated region
      $region61: #{tpu_custom_call.1} parent=5 // pred_check
        %p934 = pneg %p933
      $region62: #{tpu_custom_call.1} parent=5 // pred_check_branch
        %936 = sbr.rel (%p934) target = $region64
      $region63: #{tpu_custom_call.1} parent=5 // pred_region
        %s937 = ssub.s32 %s20, 2
        // Predicated region
        $region65: #{tpu_custom_call.1} parent=63 // pred_check
          %p938 = pneg %p222
        $region66: #{tpu_custom_call.1} parent=63 // pred_check_branch
          %940 = sbr.rel (%p938) target = $region68
        $region67: #{tpu_custom_call.1} parent=63 // pred_region
          %s941 = sand.u32 %s207, 1
          %s942 = scalar_lea.sflag [#allocation5], %s941
          %s943 = sand.u32 %s207, 1
          %s944 = smul.addr %s943, 8
          %s945 = scalar_lea.vmem [#allocation6], %s944
          %946 = dma.done %s942, 128
        $region68: #{tpu_custom_call.1} parent=63 // pred_fallthru
          _
      $region64: #{tpu_custom_call.1} parent=5 // pred_fallthru
        _
    $region6: #{tpu_custom_call.1} parent=1 // loop_footer
      %s24 = sadd.s32 1, %s20
    $region7: #{tpu_custom_call.1} parent=1 // loop_footer_branch
      %19 = sbr.rel target = $region3
    $region8: #{tpu_custom_call.1} parent=1 // loop_exit
      _
    %947 = vsyncpa [#allocation4], 1
    %s948 = scalar_lea.sflag [#allocation4], 1
    %949 = vsyncpa %s948, 1
    %950 = vsyncpa [#allocation5], 1
    %s951 = scalar_lea.sflag [#allocation5], 1
    %952 = vsyncpa %s951, 1

</llo_original>
